<compile_context>
chip_gen: v5e
topology: v5e:2x2
jax: 0.10.0
libtpu: 0.0.40
codegen_flags: <defaults>
</compile_context>

<pallas_src>
import jax
import jax.numpy as jnp
from jax import lax
from jax.experimental import pallas as pl
from jax.experimental.pallas import tpu as pltpu
import numpy as np


def _round_up(x, m):
    return ((x + m - 1) // m) * m


def _make_kernel(T, B_total, tile_b, class_counts, ragged):
    """Kernel over one batch tile; the task loop is unrolled at trace time."""

    def kernel(weights_ref, labels_ref, *args):
        logit_refs = args[:T]          # T refs, each (C_t, tile_b)
        out_ref = args[T]              # (1, 1, 128) per-tile partial-sum block
        i = pl.program_id(0)

        acc = jnp.zeros((1, tile_b), dtype=jnp.float32)
        for t in range(T):
            ct = class_counts[t]
            x = logit_refs[t][...].astype(jnp.float32)            # (ct, tile_b)
            lbl = labels_ref[pl.ds(t, 1), :]                      # (1, tile_b) i32
            cls = lax.broadcasted_iota(jnp.int32, (ct, tile_b), 0)

            # numerically stable log-sum-exp over the class (sublane) dim
            m = jnp.max(x, axis=0, keepdims=True)                 # (1, tile_b)
            lse = m + jnp.log(jnp.sum(jnp.exp(x - m), axis=0, keepdims=True))

            # fused target-logit extraction (no one-hot temporary)
            # TODO(synk): labels outside [0, C_t) silently give tgt=0 instead of
            # raising like torch.nn.functional.cross_entropy.
            tgt = jnp.sum(jnp.where(cls == lbl, x, 0.0), axis=0, keepdims=True)

            w = weights_ref[t]                                    # SMEM scalar
            acc = acc + w * (lse - tgt)

        if ragged:
            # single cheap (1, tile_b) select; also kills NaN/Inf from garbage
            # out-of-bounds columns of the last tile.
            pos = i * tile_b + lax.broadcasted_iota(jnp.int32, (1, tile_b), 1)
            acc = jnp.where(pos < B_total, acc, 0.0)

        partial = jnp.sum(acc, axis=-1, keepdims=True)            # (1, 1)
        out_ref[...] = jnp.broadcast_to(partial.reshape(1, 1, 1), out_ref.shape)

    return kernel


def multitask_loss_pallas(outputs, targets, task_weights=None, *, tile_b=None):
    """outputs: list of (B, C_t) logits (any float dtype); targets: list of (B,) ints."""
    T = len(outputs)
    assert T >= 1 and T == len(targets)
    B = int(outputs[0].shape[0])
    for o, y in zip(outputs, targets):
        assert o.ndim == 2 and int(o.shape[0]) == B, "all tasks must share batch size B"
        assert int(y.shape[0]) == B, "targets must share batch size B"
    class_counts = [int(o.shape[1]) for o in outputs]

    # Batch on the lane axis: (C_t, B) per task -> lane-dense in-kernel compute.
    logits_t = [jnp.transpose(o) for o in outputs]
    labels = jnp.stack([jnp.asarray(y).astype(jnp.int32) for y in targets], axis=0)  # (T, B)

    if task_weights is None:
        weights = jnp.ones((T,), dtype=jnp.float32)
    else:
        weights = jnp.asarray(task_weights, dtype=jnp.float32)

    # ---- padding-aware VMEM budgeting & explicit scoped limit ---------------
    try:
        vmem_cap = int(pltpu.get_tpu_info().vmem_capacity_bytes)
    except Exception:
        vmem_cap = 64 << 20
    vmem_limit = min(vmem_cap // 2, 64 << 20)   # ~64 MiB v5e/v6e, ~32 MiB v7x

    per_col_bytes = 0
    for o, c in zip(outputs, class_counts):
        it = jnp.dtype(o.dtype).itemsize
        sub = (8 * 4) // it                      # sublane tile: f32->8, bf16->16
        per_col_bytes += _round_up(c, sub) * it  # padded class (sublane) dim
    per_col_bytes += _round_up(T, 8) * 4         # labels block (i32)
    per_col_bytes *= 2                           # double buffering per input

    if tile_b is None:
        budget = (vmem_limit * 3) // 4           # headroom for output/scratch
        max_tile = max(1, budget // per_col_bytes)
        if B <= 128 or B <= max_tile:
            tile_b = B
        else:
            tile_b = min(B, max(128, (max_tile // 128) * 128))
    num_tiles = (B + tile_b - 1) // tile_b
    ragged = (B % tile_b) != 0

    in_specs = [
        pl.BlockSpec(memory_space=pltpu.MemorySpace.SMEM),                  # weights (T,)
        pl.BlockSpec((T, tile_b), lambda i: (0, i)),                        # labels (T, B)
    ] + [
        pl.BlockSpec((c, tile_b), lambda i: (0, i)) for c in class_counts   # logits (C_t, B)
    ]
    out_specs = pl.BlockSpec((1, 1, 128), lambda i: (i, 0, 0))              # per-tile partial

    grid_spec = pltpu.PrefetchScalarGridSpec(
        num_scalar_prefetch=0,
        grid=(num_tiles,),
        in_specs=in_specs,
        out_specs=out_specs,
    )

    total_c = sum(class_counts)
    padded_logit_bytes = 0
    for o, c in zip(outputs, class_counts):
        it = jnp.dtype(o.dtype).itemsize
        sub = (8 * 4) // it
        padded_logit_bytes += _round_up(c, sub) * _round_up(B, 128) * it
    cost = pl.CostEstimate(
        flops=int(6 * B * total_c),
        transcendentals=int(B * total_c + B * T),
        bytes_accessed=int(
            padded_logit_bytes
            + _round_up(T, 8) * _round_up(B, 128) * 4      # labels, padded
            + num_tiles * 128 * 4                          # partials
            + _round_up(T, 8) * 4                          # weights
        ),
    )

    kernel = _make_kernel(T, B, tile_b, class_counts, ragged)
    partials = pl.pallas_call(
        kernel,
        out_shape=jax.ShapeDtypeStruct((num_tiles, 1, 128), jnp.float32),
        grid_spec=grid_spec,
        compiler_params=pltpu.CompilerParams(
            dimension_semantics=("parallel",),   # per-tile partials -> megacore-shardable
            vmem_limit_bytes=int(vmem_limit),
        ),
        cost_estimate=cost,
    )(weights, labels, *logits_t)

    # trivial final reduction over per-tile partials + mean over the batch
    return jnp.sum(partials[:, 0, 0]) * jnp.float32(1.0 / B)


def _reference_loss(outputs, targets, task_weights=None):
    total = jnp.float32(0.0)
    for i, (lg, y) in enumerate(zip(outputs, targets)):
        logp = jax.nn.log_softmax(lg.astype(jnp.float32), axis=-1)
        ce = -jnp.mean(logp[jnp.arange(lg.shape[0]), y])
        w = 1.0 if task_weights is None else task_weights[i]
        total = total + w * ce
    return total


if __name__ == "__main__":
    key = jax.random.PRNGKey(0)
    B = 8
    class_counts = [5, 3, 7]
    task_weights = [1.0, 0.5, 2.0]

    outputs, targets = [], []
    for c in class_counts:
        key, k1, k2 = jax.random.split(key, 3)
        outputs.append(jax.random.normal(k1, (B, c), dtype=jnp.float32))
        targets.append(jax.random.randint(k2, (B,), 0, c, dtype=jnp.int32))

    # weighted case
    loss_w = multitask_loss_pallas(outputs, targets, task_weights)
    jax.block_until_ready(loss_w)
    ref_w = _reference_loss(outputs, targets, task_weights)

    # unweighted case (task_weights=None -> all 1.0)
    loss_u = multitask_loss_pallas(outputs, targets, None)
    jax.block_until_ready(loss_u)
    ref_u = _reference_loss(outputs, targets, None)

    assert np.allclose(np.asarray(loss_w), np.asarray(ref_w), rtol=1e-5, atol=1e-5), (
        loss_w, ref_w)
    assert np.allclose(np.asarray(loss_u), np.asarray(ref_u), rtol=1e-5, atol=1e-5), (
        loss_u, ref_u)

    print("KERNEL_OK")
</pallas_src>

<mosaic_0001>
module attributes {stable_mosaic.version = 11 : i64} {
  func.func @kernel(%arg0: i32, %arg1: memref<3xf32, #tpu.memory_space<smem>>, %arg2: memref<3x8xi32, #tpu.memory_space<vmem>>, %arg3: memref<5x8xf32, #tpu.memory_space<vmem>>, %arg4: memref<3x8xf32, #tpu.memory_space<vmem>>, %arg5: memref<7x8xf32, #tpu.memory_space<vmem>>, %arg6: memref<1x1x128xf32, #tpu.memory_space<vmem>>) attributes {dimension_semantics = [#tpu.dimension_semantics<parallel>], iteration_bounds = array<i64: 1>, scalar_prefetch = 0 : i64, scratch_operands = 0 : i64, tpu.core_type = #tpu.core_type<tc>, window_params = [{transform_indices = @transform_0, window_bounds = array<i64: 3>}, {transform_indices = @transform_1, window_bounds = array<i64: 3, 8>}, {transform_indices = @transform_2, window_bounds = array<i64: 5, 8>}, {transform_indices = @transform_3, window_bounds = array<i64: 3, 8>}, {transform_indices = @transform_4, window_bounds = array<i64: 7, 8>}, {transform_indices = @transform_5, window_bounds = array<i64: 1, 1, 128>}]} {
    %cst = arith.constant 0.000000e+00 : f32
    %0 = vector.broadcast %cst : f32 to vector<1x8xf32>
    %c0 = arith.constant 0 : index
    %c0_0 = arith.constant 0 : index
    %1 = vector.load %arg3[%c0, %c0_0] : memref<5x8xf32, #tpu.memory_space<vmem>>, vector<5x8xf32>
    %c0_1 = arith.constant 0 : index
    %c0_2 = arith.constant 0 : index
    %2 = vector.load %arg2[%c0_1, %c0_2] : memref<3x8xi32, #tpu.memory_space<vmem>>, vector<1x8xi32>
    %3 = tpu.iota {dimensions = array<i32: 0>} : vector<5x8xi32>
    %cst_3 = arith.constant dense<0xFF800000> : vector<8xf32>
    %4 = vector.multi_reduction <maximumf>, %1, %cst_3 [0] : vector<5x8xf32> to vector<8xf32>
    %5 = vector.shape_cast %4 : vector<8xf32> to vector<1x8xf32>
    %6 = vector.broadcast %5 : vector<1x8xf32> to vector<5x8xf32>
    %7 = arith.subf %1, %6 : vector<5x8xf32>
    %8 = math.exp %7 : vector<5x8xf32>
    %cst_4 = arith.constant dense<0.000000e+00> : vector<8xf32>
    %9 = vector.multi_reduction <add>, %8, %cst_4 [0] : vector<5x8xf32> to vector<8xf32>
    %10 = vector.shape_cast %9 : vector<8xf32> to vector<1x8xf32>
    %11 = math.log %10 : vector<1x8xf32>
    %12 = arith.addf %5, %11 : vector<1x8xf32>
    %13 = vector.broadcast %2 : vector<1x8xi32> to vector<5x8xi32>
    %14 = arith.cmpi eq, %3, %13 : vector<5x8xi32>
    %cst_5 = arith.constant 0.000000e+00 : f32
    %15 = vector.broadcast %cst_5 : f32 to vector<5x8xf32>
    %16 = arith.select %14, %1, %15 : vector<5x8xi1>, vector<5x8xf32>
    %cst_6 = arith.constant dense<0.000000e+00> : vector<8xf32>
    %17 = vector.multi_reduction <add>, %16, %cst_6 [0] : vector<5x8xf32> to vector<8xf32>
    %18 = vector.shape_cast %17 : vector<8xf32> to vector<1x8xf32>
    %c0_7 = arith.constant 0 : index
    %19 = memref.load %arg1[%c0_7] : memref<3xf32, #tpu.memory_space<smem>>
    %20 = arith.subf %12, %18 : vector<1x8xf32>
    %21 = vector.broadcast %19 : f32 to vector<1x8xf32>
    %22 = arith.mulf %21, %20 : vector<1x8xf32>
    %23 = arith.addf %0, %22 : vector<1x8xf32>
    %c0_8 = arith.constant 0 : index
    %c0_9 = arith.constant 0 : index
    %24 = vector.load %arg4[%c0_8, %c0_9] : memref<3x8xf32, #tpu.memory_space<vmem>>, vector<3x8xf32>
    %c1 = arith.constant 1 : index
    %c0_10 = arith.constant 0 : index
    %25 = vector.load %arg2[%c1, %c0_10] : memref<3x8xi32, #tpu.memory_space<vmem>>, vector<1x8xi32>
    %26 = tpu.iota {dimensions = array<i32: 0>} : vector<3x8xi32>
    %cst_11 = arith.constant dense<0xFF800000> : vector<8xf32>
    %27 = vector.multi_reduction <maximumf>, %24, %cst_11 [0] : vector<3x8xf32> to vector<8xf32>
    %28 = vector.shape_cast %27 : vector<8xf32> to vector<1x8xf32>
    %29 = vector.broadcast %28 : vector<1x8xf32> to vector<3x8xf32>
    %30 = arith.subf %24, %29 : vector<3x8xf32>
    %31 = math.exp %30 : vector<3x8xf32>
    %cst_12 = arith.constant dense<0.000000e+00> : vector<8xf32>
    %32 = vector.multi_reduction <add>, %31, %cst_12 [0] : vector<3x8xf32> to vector<8xf32>
    %33 = vector.shape_cast %32 : vector<8xf32> to vector<1x8xf32>
    %34 = math.log %33 : vector<1x8xf32>
    %35 = arith.addf %28, %34 : vector<1x8xf32>
    %36 = vector.broadcast %25 : vector<1x8xi32> to vector<3x8xi32>
    %37 = arith.cmpi eq, %26, %36 : vector<3x8xi32>
    %cst_13 = arith.constant 0.000000e+00 : f32
    %38 = vector.broadcast %cst_13 : f32 to vector<3x8xf32>
    %39 = arith.select %37, %24, %38 : vector<3x8xi1>, vector<3x8xf32>
    %cst_14 = arith.constant dense<0.000000e+00> : vector<8xf32>
    %40 = vector.multi_reduction <add>, %39, %cst_14 [0] : vector<3x8xf32> to vector<8xf32>
    %41 = vector.shape_cast %40 : vector<8xf32> to vector<1x8xf32>
    %c1_15 = arith.constant 1 : index
    %42 = memref.load %arg1[%c1_15] : memref<3xf32, #tpu.memory_space<smem>>
    %43 = arith.subf %35, %41 : vector<1x8xf32>
    %44 = vector.broadcast %42 : f32 to vector<1x8xf32>
    %45 = arith.mulf %44, %43 : vector<1x8xf32>
    %46 = arith.addf %23, %45 : vector<1x8xf32>
    %c0_16 = arith.constant 0 : index
    %c0_17 = arith.constant 0 : index
    %47 = vector.load %arg5[%c0_16, %c0_17] : memref<7x8xf32, #tpu.memory_space<vmem>>, vector<7x8xf32>
    %c2 = arith.constant 2 : index
    %c0_18 = arith.constant 0 : index
    %48 = vector.load %arg2[%c2, %c0_18] : memref<3x8xi32, #tpu.memory_space<vmem>>, vector<1x8xi32>
    %49 = tpu.iota {dimensions = array<i32: 0>} : vector<7x8xi32>
    %cst_19 = arith.constant dense<0xFF800000> : vector<8xf32>
    %50 = vector.multi_reduction <maximumf>, %47, %cst_19 [0] : vector<7x8xf32> to vector<8xf32>
    %51 = vector.shape_cast %50 : vector<8xf32> to vector<1x8xf32>
    %52 = vector.broadcast %51 : vector<1x8xf32> to vector<7x8xf32>
    %53 = arith.subf %47, %52 : vector<7x8xf32>
    %54 = math.exp %53 : vector<7x8xf32>
    %cst_20 = arith.constant dense<0.000000e+00> : vector<8xf32>
    %55 = vector.multi_reduction <add>, %54, %cst_20 [0] : vector<7x8xf32> to vector<8xf32>
    %56 = vector.shape_cast %55 : vector<8xf32> to vector<1x8xf32>
    %57 = math.log %56 : vector<1x8xf32>
    %58 = arith.addf %51, %57 : vector<1x8xf32>
    %59 = vector.broadcast %48 : vector<1x8xi32> to vector<7x8xi32>
    %60 = arith.cmpi eq, %49, %59 : vector<7x8xi32>
    %cst_21 = arith.constant 0.000000e+00 : f32
    %61 = vector.broadcast %cst_21 : f32 to vector<7x8xf32>
    %62 = arith.select %60, %47, %61 : vector<7x8xi1>, vector<7x8xf32>
    %cst_22 = arith.constant dense<0.000000e+00> : vector<8xf32>
    %63 = vector.multi_reduction <add>, %62, %cst_22 [0] : vector<7x8xf32> to vector<8xf32>
    %64 = vector.shape_cast %63 : vector<8xf32> to vector<1x8xf32>
    %c2_23 = arith.constant 2 : index
    %65 = memref.load %arg1[%c2_23] : memref<3xf32, #tpu.memory_space<smem>>
    %66 = arith.subf %58, %64 : vector<1x8xf32>
    %67 = vector.broadcast %65 : f32 to vector<1x8xf32>
    %68 = arith.mulf %67, %66 : vector<1x8xf32>
    %69 = arith.addf %46, %68 : vector<1x8xf32>
    %cst_24 = arith.constant dense<0.000000e+00> : vector<1xf32>
    %70 = vector.multi_reduction <add>, %69, %cst_24 [1] : vector<1x8xf32> to vector<1xf32>
    %71 = vector.shape_cast %70 : vector<1xf32> to vector<1x1xf32>
    %72 = vector.shape_cast %71 : vector<1x1xf32> to vector<1x1x1xf32>
    %73 = vector.shape_cast %72 : vector<1x1x1xf32> to vector<1x1x1xf32>
    %74 = vector.broadcast %73 : vector<1x1x1xf32> to vector<1x1x128xf32>
    %c0_25 = arith.constant 0 : index
    %c0_26 = arith.constant 0 : index
    %c0_27 = arith.constant 0 : index
    %75 = vector.load %arg6[%c0_25, %c0_26, %c0_27] : memref<1x1x128xf32, #tpu.memory_space<vmem>>, vector<1x1x128xf32>
    tpu.vector_store %arg6[%c0_25, %c0_26, %c0_27], %74 {strides = array<i32>} : memref<1x1x128xf32, #tpu.memory_space<vmem>>, vector<1x1x128xf32>,
    return
  }
  func.func @transform_0(%arg0: i32) -> i32 {
    %c0_i32 = arith.constant 0 : i32
    %c0_i32_0 = arith.constant 0 : i32
    return %c0_i32 : i32
  }
  func.func @transform_1(%arg0: i32) -> (i32, i32) {
    %c0_i32 = arith.constant 0 : i32
    %c0_i32_0 = arith.constant 0 : i32
    return %c0_i32, %arg0 : i32, i32
  }
  func.func @transform_2(%arg0: i32) -> (i32, i32) {
    %c0_i32 = arith.constant 0 : i32
    %c0_i32_0 = arith.constant 0 : i32
    return %c0_i32, %arg0 : i32, i32
  }
  func.func @transform_3(%arg0: i32) -> (i32, i32) {
    %c0_i32 = arith.constant 0 : i32
    %c0_i32_0 = arith.constant 0 : i32
    return %c0_i32, %arg0 : i32, i32
  }
  func.func @transform_4(%arg0: i32) -> (i32, i32) {
    %c0_i32 = arith.constant 0 : i32
    %c0_i32_0 = arith.constant 0 : i32
    return %c0_i32, %arg0 : i32, i32
  }
  func.func @transform_5(%arg0: i32) -> (i32, i32, i32) {
    %c0_i32 = arith.constant 0 : i32
    %c0_i32_0 = arith.constant 0 : i32
    %c0_i32_1 = arith.constant 0 : i32
    return %arg0, %c0_i32, %c0_i32_0 : i32, i32, i32
  }
}

</mosaic_0001>

<llo_original>
// kernel: tpu_custom_call.1
$region0: #{tpu_custom_call.1}
  #allocation0 [shape = 'u32[]', space=smem, size = 0x4, offset = 0x4, fixed_abs, tag = 'smem constant byte address 0x4 - core index']
  #allocation1 [shape = 'u32[72,128]{1,0:T(1,128)}', space=vmem, size = 0x9000, scoped, tag = 'internal scratch']
  %s0 = inlined_call_operand.hbm [shape: f32[3], index: 0, kind: input, shape index: {}]
  %s1 = inlined_call_operand.hbm [shape: s32[3,8], index: 1, kind: input, shape index: {}]
  %s2 = inlined_call_operand.hbm [shape: f32[5,8], index: 2, kind: input, shape index: {}]
  %s3 = inlined_call_operand.hbm [shape: f32[3,8], index: 3, kind: input, shape index: {}]
  %s4 = inlined_call_operand.hbm [shape: f32[7,8], index: 4, kind: input, shape index: {}]
  %s5 = inlined_call_operand.hbm [shape: f32[1,1,128], index: 5, kind: output, shape index: {}]
  %s6 = sld [smem:[#allocation0]]
  $region50: #{tpu_custom_call.1} parent=0
    _
  %s8 = ssub.s32 1, %s6
  %s9 = scalar_select 0, %s8, %s6
  $region1: #{tpu_custom_call.1} parent=0
    #allocation2 [shape = 'u8[512]{0}', space=smem, size = 0x200, scoped, tag = 'input window, operand 0, single buffered']
    #allocation3 [shape = 's32[1]{0}', space=sflag, size = 0x4, scoped, tag = 'scoped memory for tpu_custom_call.1']
    #allocation4 [shape = 's32[1]{0}', space=sflag, size = 0x4, scoped, tag = 'scoped memory for tpu_custom_call.1']
    #allocation5 [shape = 's32[1]{0}', space=sflag, size = 0x4, scoped, tag = 'scoped memory for tpu_custom_call.1']
    #allocation6 [shape = 'u8[2048]{0}', space=vmem, size = 0x800, scoped, tag = 'input window, operand 1, single buffered']
    #allocation7 [shape = 'u8[4096]{0}', space=vmem, size = 0x1000, scoped, tag = 'input window, operand 2, single buffered']
    #allocation8 [shape = 's32[1]{0}', space=sflag, size = 0x4, scoped, tag = 'scoped memory for tpu_custom_call.1']
    #allocation9 [shape = 'u8[2048]{0}', space=vmem, size = 0x800, scoped, tag = 'input window, operand 3, single buffered']
    #allocation10 [shape = 'u8[4096]{0}', space=vmem, size = 0x1000, scoped, tag = 'input window, operand 4, single buffered']
    #allocation11 [shape = 's32[1]{0}', space=sflag, size = 0x4, scoped, tag = 'scoped memory for tpu_custom_call.1']
    #allocation12 [shape = 'u8[512]{0}', space=vmem, size = 0x400, scoped, tag = 'output window, operand 0, single buffered']
    %10 = vsyncpa [#allocation5], 0
    %11 = vsyncpa [#allocation3], 0
    %12 = vsyncpa [#allocation8], 0
    %13 = vsyncpa [#allocation11], 0
    %14 = vsyncpa [#allocation4], 0
    // Predicated region
    $region2: #{tpu_custom_call.1} parent=1 // pred_check
      _
    $region3: #{tpu_custom_call.1} parent=1 // pred_check_branch
      %16 = sbr.rel (0) target = $region5
    $region4: #{tpu_custom_call.1} parent=1 // pred_region
      %18 = vsyncadd [#allocation5], 0
      %s20 = sshll.u32 %s0, 4
      %s21 = int_to_ptr.hbm [resolvable:$true] %s20
      %23 = dma.hbm_to_smem %s21, 16, [#allocation2], [#allocation5]
    $region5: #{tpu_custom_call.1} parent=1 // pred_fallthru
      _
    // Predicated region
    $region6: #{tpu_custom_call.1} parent=1 // pred_check
      _
    $region7: #{tpu_custom_call.1} parent=1 // pred_check_branch
      %25 = sbr.rel (0) target = $region9
    $region8: #{tpu_custom_call.1} parent=1 // pred_region
      %27 = vsyncadd [#allocation3], 0
      %s29 = sshll.u32 %s1, 4
      %s30 = int_to_ptr.hbm [resolvable:$true] %s29
      %s31 = sshll.u32 [#allocation6], 4
      %s32 = int_to_ptr.vmem [resolvable:$true] %s31
      %34 = dma.hbm_to_vmem [thread:$0]  %s30, 64, %s32, [#allocation3]
    $region9: #{tpu_custom_call.1} parent=1 // pred_fallthru
      _
    // Predicated region
    $region10: #{tpu_custom_call.1} parent=1 // pred_check
      _
    $region11: #{tpu_custom_call.1} parent=1 // pred_check_branch
      %36 = sbr.rel (0) target = $region13
    $region12: #{tpu_custom_call.1} parent=1 // pred_region
      %38 = vsyncadd [#allocation8], 0
      %s40 = sshll.u32 %s2, 4
      %s41 = int_to_ptr.hbm [resolvable:$true] %s40
      %s42 = sshll.u32 [#allocation7], 4
      %s43 = int_to_ptr.vmem [resolvable:$true] %s42
      %45 = dma.hbm_to_vmem [thread:$0]  %s41, 128, %s43, [#allocation8]
    $region13: #{tpu_custom_call.1} parent=1 // pred_fallthru
      _
    // Predicated region
    $region14: #{tpu_custom_call.1} parent=1 // pred_check
      _
    $region15: #{tpu_custom_call.1} parent=1 // pred_check_branch
      %47 = sbr.rel (0) target = $region17
    $region16: #{tpu_custom_call.1} parent=1 // pred_region
      %49 = vsyncadd [#allocation8], 0
      %s51 = sshll.u32 %s3, 4
      %s52 = int_to_ptr.hbm [resolvable:$true] %s51
      %s53 = sshll.u32 [#allocation9], 4
      %s54 = int_to_ptr.vmem [resolvable:$true] %s53
      %56 = dma.hbm_to_vmem [thread:$0]  %s52, 64, %s54, [#allocation8]
    $region17: #{tpu_custom_call.1} parent=1 // pred_fallthru
      _
    // Predicated region
    $region18: #{tpu_custom_call.1} parent=1 // pred_check
      _
    $region19: #{tpu_custom_call.1} parent=1 // pred_check_branch
      %58 = sbr.rel (0) target = $region21
    $region20: #{tpu_custom_call.1} parent=1 // pred_region
      %60 = vsyncadd [#allocation11], 0
      %s62 = sshll.u32 %s4, 4
      %s63 = int_to_ptr.hbm [resolvable:$true] %s62
      %s64 = sshll.u32 [#allocation10], 4
      %s65 = int_to_ptr.vmem [resolvable:$true] %s64
      %67 = dma.hbm_to_vmem [thread:$0]  %s63, 128, %s65, [#allocation11]
    $region21: #{tpu_custom_call.1} parent=1 // pred_fallthru
      _
    // Predicated region
    $region22: #{tpu_custom_call.1} parent=1 // pred_check
      _
    $region23: #{tpu_custom_call.1} parent=1 // pred_check_branch
      %69 = sbr.rel (0) target = $region25
    $region24: #{tpu_custom_call.1} parent=1 // pred_region
      %71 = dma.done [#allocation5], 16
    $region25: #{tpu_custom_call.1} parent=1 // pred_fallthru
      _
    // Predicated region
    $region26: #{tpu_custom_call.1} parent=1 // pred_check
      _
    $region27: #{tpu_custom_call.1} parent=1 // pred_check_branch
      %73 = sbr.rel (0) target = $region29
    $region28: #{tpu_custom_call.1} parent=1 // pred_region
      %75 = dma.done [#allocation3], 64
    $region29: #{tpu_custom_call.1} parent=1 // pred_fallthru
      _
    // Predicated region
    $region30: #{tpu_custom_call.1} parent=1 // pred_check
      _
    $region31: #{tpu_custom_call.1} parent=1 // pred_check_branch
      %77 = sbr.rel (0) target = $region33
    $region32: #{tpu_custom_call.1} parent=1 // pred_region
      %79 = dma.done [#allocation8], 128
    $region33: #{tpu_custom_call.1} parent=1 // pred_fallthru
      _
    // Predicated region
    $region34: #{tpu_custom_call.1} parent=1 // pred_check
      _
    $region35: #{tpu_custom_call.1} parent=1 // pred_check_branch
      %81 = sbr.rel (0) target = $region37
    $region36: #{tpu_custom_call.1} parent=1 // pred_region
      %83 = dma.done [#allocation8], 64
    $region37: #{tpu_custom_call.1} parent=1 // pred_fallthru
      _
    // Predicated region
    $region38: #{tpu_custom_call.1} parent=1 // pred_check
      _
    $region39: #{tpu_custom_call.1} parent=1 // pred_check_branch
      %85 = sbr.rel (0) target = $region41
    $region40: #{tpu_custom_call.1} parent=1 // pred_region
      %87 = dma.done [#allocation11], 128
    $region41: #{tpu_custom_call.1} parent=1 // pred_fallthru
      _
    %88 = sfence
    %v89 = vld [vmem:[#allocation7] sm:$0x1f]
    %v90 = vld [vmem:[#allocation6] sm:$0x1]
    %v91 = vlaneseq
    %v92 = vshrl.u32 %v91, 7
    %vm93 = vcmask 61440
    %v94 = vsel %vm93, %v89, -inf
    %v95 = vrot.slane %v94, 4
    %v96 = vmax.f32 %v94, %v95
    %v97 = vrot.slane %v96, 2
    %v98 = vmax.f32 %v96, %v97
    %v99 = vrot.slane %v98, 1
    %v100 = vmax.f32 %v98, %v99
    %v101 = vsub.f32 %v89, %v100
    %v102 = vmul.f32 %v101, 1.442695
    %v103 = vpow.pop %v102
    %v104 = vsel %vm93, %v103, 0.0
    %v105 = vrot.slane %v104, 4
    %v106 = vadd.f32 %v104, %v105
    %v107 = vrot.slane %v106, 2
    %v108 = vadd.f32 %v106, %v107
    %v109 = vrot.slane %v108, 1
    %v110 = vadd.f32 %v108, %v109
    %v111 = vlog2.pop %v110
    %v112 = vmul.f32 %v111, 0.6931472
    %v113 = vadd.f32 %v100, %v112
    %v114 = vperm.slane %v90, 0
    %vm115 = vcmp.eq.s32.totalorder %v92, %v114
    %v116 = vsel %vm115, %v89, 0.0
    %v117 = vsel %vm93, %v116, 0.0
    %v118 = vrot.slane %v117, 4
    %v119 = vadd.f32 %v117, %v118
    %v120 = vrot.slane %v119, 2
    %v121 = vadd.f32 %v119, %v120
    %v122 = vrot.slane %v121, 1
    %v123 = vadd.f32 %v121, %v122
    %s124 = sld [smem:[#allocation2]]
    %v125 = vsub.f32 %v113, %v123
    %v126 = vstv %s124
    %v127 = vmul.f32 %v126, %v125
    %v128 = vadd.f32 %v127, 0.0
    %v129 = vld [vmem:[#allocation9] sm:$0x7]
    %v130 = vld [vmem:[#allocation6 + $0x1] sm:$0x1]
    %vm131 = vcmask 59392
    %v132 = vsel %vm131, %v129, -inf
    %v133 = vrot.slane %v132, 4
    %v134 = vmax.f32 %v132, %v133
    %v135 = vrot.slane %v134, 2
    %v136 = vmax.f32 %v134, %v135
    %v137 = vrot.slane %v136, 1
    %v138 = vmax.f32 %v136, %v137
    %v139 = vsub.f32 %v129, %v138
    %v140 = vmul.f32 %v139, 1.442695
    %v141 = vpow.pop %v140
    %v142 = vsel %vm131, %v141, 0.0
    %v143 = vrot.slane %v142, 4
    %v144 = vadd.f32 %v142, %v143
    %v145 = vrot.slane %v144, 2
    %v146 = vadd.f32 %v144, %v145
    %v147 = vrot.slane %v146, 1
    %v148 = vadd.f32 %v146, %v147
    %v149 = vlog2.pop %v148
    %v150 = vmul.f32 %v149, 0.6931472
    %v151 = vadd.f32 %v138, %v150
    %v152 = vperm.slane %v130, 0
    %vm153 = vcmp.eq.s32.totalorder %v92, %v152
    %v154 = vsel %vm153, %v129, 0.0
    %v155 = vsel %vm131, %v154, 0.0
    %v156 = vrot.slane %v155, 4
    %v157 = vadd.f32 %v155, %v156
    %v158 = vrot.slane %v157, 2
    %v159 = vadd.f32 %v157, %v158
    %v160 = vrot.slane %v159, 1
    %v161 = vadd.f32 %v159, %v160
    %s162 = sld [smem:[#allocation2 + $0x1]]
    %v163 = vsub.f32 %v151, %v161
    %v164 = vstv %s162
    %v165 = vmul.f32 %v164, %v163
    %v166 = vadd.f32 %v128, %v165
    %v167 = vld [vmem:[#allocation10] sm:$0x7f]
    %v168 = vld [vmem:[#allocation6 + $0x2] sm:$0x1]
    %vm169 = vcmask 63488
    %v170 = vsel %vm169, %v167, -inf
    %v171 = vrot.slane %v170, 4
    %v172 = vmax.f32 %v170, %v171
    %v173 = vrot.slane %v172, 2
    %v174 = vmax.f32 %v172, %v173
    %v175 = vrot.slane %v174, 1
    %v176 = vmax.f32 %v174, %v175
    %v177 = vsub.f32 %v167, %v176
    %v178 = vmul.f32 %v177, 1.442695
    %v179 = vpow.pop %v178
    %v180 = vsel %vm169, %v179, 0.0
    %v181 = vrot.slane %v180, 4
    %v182 = vadd.f32 %v180, %v181
    %v183 = vrot.slane %v182, 2
    %v184 = vadd.f32 %v182, %v183
    %v185 = vrot.slane %v184, 1
    %v186 = vadd.f32 %v184, %v185
    %v187 = vlog2.pop %v186
    %v188 = vmul.f32 %v187, 0.6931472
    %v189 = vadd.f32 %v176, %v188
    %v190 = vperm.slane %v168, 0
    %vm191 = vcmp.eq.s32.totalorder %v92, %v190
    %v192 = vsel %vm191, %v167, 0.0
    %v193 = vsel %vm169, %v192, 0.0
    %v194 = vrot.slane %v193, 4
    %v195 = vadd.f32 %v193, %v194
    %v196 = vrot.slane %v195, 2
    %v197 = vadd.f32 %v195, %v196
    %v198 = vrot.slane %v197, 1
    %v199 = vadd.f32 %v197, %v198
    %s200 = sld [smem:[#allocation2 + $0x2]]
    %v201 = vsub.f32 %v189, %v199
    %v202 = vstv %s200
    %v203 = vmul.f32 %v202, %v201
    %v204 = vadd.f32 %v166, %v203
    %vm205 = vcmask 64512
    %v206 = vsel %vm205, %v204, 0.0
    %207 = vadd.xlane.f32.xlu0 %v206
    %v208 = vpop.xlane.xlu0 %207
    %209 = vst [vmem:[#allocation12] sm:$0x1] %v208
    // Predicated region
    $region42: #{tpu_custom_call.1} parent=1 // pred_check
      _
    $region43: #{tpu_custom_call.1} parent=1 // pred_check_branch
      %211 = sbr.rel (0) target = $region45
    $region44: #{tpu_custom_call.1} parent=1 // pred_region
      %213 = vsyncadd [#allocation4], 0
      %s215 = sshll.u32 [#allocation12], 4
      %s216 = int_to_ptr.vmem [resolvable:$true] %s215
      %s217 = sshll.u32 %s5, 4
      %s218 = int_to_ptr.hbm [resolvable:$true] %s217
      %220 = dma.vmem_to_hbm [thread:$0]  %s216, 16, %s218, [#allocation4]
    $region45: #{tpu_custom_call.1} parent=1 // pred_fallthru
      _
    // Predicated region
    $region46: #{tpu_custom_call.1} parent=1 // pred_check
      _
    $region47: #{tpu_custom_call.1} parent=1 // pred_check_branch
      %222 = sbr.rel (0) target = $region49
    $region48: #{tpu_custom_call.1} parent=1 // pred_region
      %224 = dma.done [#allocation4], 16
    $region49: #{tpu_custom_call.1} parent=1 // pred_fallthru
      _
    %225 = vsyncpa [#allocation3], 1
    %226 = vsyncpa [#allocation8], 1
    %227 = vsyncpa [#allocation11], 1
    %228 = vsyncpa [#allocation4], 1
    %229 = vsyncpa [#allocation5], 1

</llo_original>
